<compile_context>
chip_gen: v5e
topology: v5e:2x2
jax: 0.10.0
libtpu: 0.0.40
codegen_flags: <defaults>
</compile_context>

<pallas_src>
import functools

import jax
import jax.numpy as jnp
from jax import lax
from jax.experimental import pallas as pl
from jax.experimental.pallas import tpu as pltpu

_BN_EPS = 1e-5  # nn.BatchNorm1d default


# --------------------------------------------------------------------------
# Pass 1: y = x @ W^T  (bf16 MXU, f32 accumulation) + per-feature batch stats
# --------------------------------------------------------------------------
def _matmul_stats_kernel(x_ref, wt_ref, y_ref, stats_ref):
    """Grid step (i, m): one (tm, tn) pre-activation tile + stats accumulation.

    x_ref:     (TM, K)  bf16 input rows for M-tile m
    wt_ref:    (K, TN)  bf16 pre-transposed weight tile (lane-dense)
    y_ref:     (TM, TN) bf16 pre-activation tile (written back to HBM)
    stats_ref: (2, TN)  f32, resident across the M ("arbitrary") axis:
               row 0 = sum(y), row 1 = sum(y*y)
    """
    m = pl.program_id(1)

    @pl.when(m == 0)
    def _():
        stats_ref[...] = jnp.zeros_like(stats_ref)

    y = jnp.dot(x_ref[...], wt_ref[...], preferred_element_type=jnp.float32)
    y_ref[...] = y.astype(y_ref.dtype)

    # Per-feature partial sums (cross-sublane reductions -> XLU slot, exact f32
    # accumulation across M tiles in the resident accumulator).
    stats_ref[0:1, :] += jnp.sum(y, axis=0, keepdims=True)
    stats_ref[1:2, :] += jnp.sum(y * y, axis=0, keepdims=True)


# --------------------------------------------------------------------------
# Pass 2: fold BatchNorm into scale/shift, apply + ReLU
# --------------------------------------------------------------------------
def _bn_relu_kernel(y_ref, stats_ref, gamma_ref, beta_ref, o_ref, *, inv_m):
    """Grid step (i, m): out = max(y * scale + shift, 0).

    y_ref:     (TM, TN) bf16 pre-activation tile
    stats_ref: (2, TN)  f32 [sum(y); sum(y*y)] for this feature tile
    gamma_ref: (1, TN)  f32 batch-norm gain
    beta_ref:  (1, TN)  f32 batch-norm shift
    o_ref:     (TM, TN) output tile
    """
    mean = stats_ref[0:1, :] * inv_m
    # Clamp: E[y^2] - mean^2 can go slightly negative from f32 cancellation.
    var = jnp.maximum(stats_ref[1:2, :] * inv_m - mean * mean, 0.0)
    scale = gamma_ref[...] * lax.rsqrt(var + _BN_EPS)   # rsqrt -> EUP slot
    shift = beta_ref[...] - mean * scale

    # Fused scale/shift + ReLU + store (single pass over the tile).
    # Dropout with the module default dropout_rate=0.0 is identity.
    # TODO(synk): implement dropout_rate > 0 with pltpu.prng_seed/prng_random_bits.
    y = y_ref[...].astype(jnp.float32)
    o_ref[...] = jnp.maximum(y * scale + shift, 0.0).astype(o_ref.dtype)


# --------------------------------------------------------------------------
# VMEM budgeting helpers
# --------------------------------------------------------------------------
def _vmem_cap_bytes():
    """~85% of the chip's physical VMEM (128 MiB v5e/v6e, 64 MiB/core v7x)."""
    try:
        cap = pltpu.get_tpu_info().vmem_capacity_bytes
    except Exception:  # pragma: no cover - conservative fallback
        cap = 64 * 1024 * 1024
    return int(cap * 0.85)


def _vmem_limit(est_bytes, cap_bytes):
    """~20% headroom over the computed footprint, floored at the 32 MiB
    scoped-VMEM default and capped at the per-chip limit."""
    return int(min(max(32 * 1024 * 1024, int(est_bytes * 1.2)), cap_bytes))


# --------------------------------------------------------------------------
# Wrapper: forward pass equivalent to poem FullyConnected.forward
# (training mode, use_batch_norm=True, dropout_rate=0.0)
# --------------------------------------------------------------------------
def fully_connected(x, w, b, gamma, beta, *, weight_max_norm=0.0,
                    is_training=True, tm=512, tn=256, out_dtype=None):
    # --- glue: weight max-norm clipping (LinearWithClipping); 0.0 => no clip
    if weight_max_norm > 0.0:
        norm = jnp.linalg.norm(w)
        w = jnp.where(norm > weight_max_norm, w * weight_max_norm / norm, w)

    # NOTE: `b` is intentionally not passed to the kernel: with training-mode
    # BatchNorm the per-feature constant bias is removed exactly by the
    # batch-mean subtraction.
    # TODO(synk): an eval-mode (running-stats) BatchNorm path must restore `b`
    # and is not implemented; BatchNorm running_mean/running_var updates are
    # not produced (forward-only kernel).  `is_training` only gates dropout,
    # which is identity at the module-default dropout_rate=0.0.
    del b

    original_shape = x.shape
    x2 = x.reshape(-1, original_shape[-1]) if x.ndim == 3 else x
    M, K = x2.shape
    H = w.shape[0]
    out_dtype = x2.dtype if out_dtype is None else out_dtype
    out_bytes = jnp.dtype(out_dtype).itemsize

    # ---- tile selection -----------------------------------------------------
    tn = min(tn, H)
    # Keep >= 2 feature tiles when possible (v7x megacore shards the "parallel"
    # H axis across its 2 TensorCores) without dropping below 128 lanes.
    if H // tn < 2 and tn >= 256 and H % (tn // 2) == 0:
        tn //= 2
    assert H % tn == 0, "hidden dim must be a multiple of the feature tile"
    tm = min(tm, M)
    assert M % tm == 0, "batch rows must be a multiple of the M tile"
    # TODO(synk): pad/mask ragged M and H instead of asserting.

    # Pre-transpose weight to (K, H) and cast matmul operands to bf16 once, in
    # the wrapper; BN statistics / elementwise math stay in f32.
    x_bf = x2.astype(jnp.bfloat16)
    wt_bf = w.T.astype(jnp.bfloat16)                 # (K, H), lane-dense tiles
    gamma2 = gamma.reshape(1, H).astype(jnp.float32)
    beta2 = beta.reshape(1, H).astype(jnp.float32)

    vmem_cap = _vmem_cap_bytes()

    # ---- pass 1: matmul + batch statistics ----------------------------------
    est1 = (2 * tm * K * 2          # x tile bf16, double-buffered
            + 2 * K * tn * 2        # weight tile bf16, double-buffered
            + 2 * tm * tn * 2       # y output tile bf16, double-buffered
            + 2 * 2 * tn * 4        # stats accumulator tile, double-buffered
            + 2 * tm * tn * 4)      # in-kernel f32 y (+ y*y temp)
    y_bf, stats = pl.pallas_call(
        _matmul_stats_kernel,
        out_shape=(jax.ShapeDtypeStruct((M, H), jnp.bfloat16),
                   jax.ShapeDtypeStruct((2, H), jnp.float32)),
        grid_spec=pltpu.PrefetchScalarGridSpec(
            num_scalar_prefetch=0,
            grid=(H // tn, M // tm),                 # H parallel, M (stats) last
            in_specs=[
                pl.BlockSpec((tm, K), lambda i, m: (m, 0)),   # x rows per M tile
                pl.BlockSpec((K, tn), lambda i, m: (0, i)),   # weight tile
            ],
            out_specs=[
                pl.BlockSpec((tm, tn), lambda i, m: (m, i)),  # y tile
                pl.BlockSpec((2, tn), lambda i, m: (0, i)),   # stats accumulator
            ],
        ),
        compiler_params=pltpu.CompilerParams(
            dimension_semantics=("parallel", "arbitrary"),
            vmem_limit_bytes=_vmem_limit(est1, vmem_cap)),
    )(x_bf, wt_bf)

    # ---- pass 2: folded BN scale/shift + ReLU --------------------------------
    est2 = (2 * tm * tn * 2             # y tile bf16, double-buffered
            + 2 * 2 * tn * 4            # stats tile
            + 2 * 2 * 1 * tn * 4        # gamma / beta tiles
            + 2 * tm * tn * out_bytes   # output tile, double-buffered
            + tm * tn * 4)              # in-kernel f32 temp
    out = pl.pallas_call(
        functools.partial(_bn_relu_kernel, inv_m=1.0 / M),
        out_shape=jax.ShapeDtypeStruct((M, H), out_dtype),
        grid_spec=pltpu.PrefetchScalarGridSpec(
            num_scalar_prefetch=0,
            grid=(H // tn, M // tm),
            in_specs=[
                pl.BlockSpec((tm, tn), lambda i, m: (m, i)),  # y tile
                pl.BlockSpec((2, tn), lambda i, m: (0, i)),   # stats
                pl.BlockSpec((1, tn), lambda i, m: (0, i)),   # gamma
                pl.BlockSpec((1, tn), lambda i, m: (0, i)),   # beta
            ],
            out_specs=pl.BlockSpec((tm, tn), lambda i, m: (m, i)),
        ),
        compiler_params=pltpu.CompilerParams(
            dimension_semantics=("parallel", "parallel"),
            vmem_limit_bytes=_vmem_limit(est2, vmem_cap)),
    )(y_bf, stats, gamma2, beta2)

    if x.ndim == 3:
        out = out.reshape(original_shape[0], original_shape[1], H)
    return out


def _reference(x, w, b, gamma, beta):
    """Pure-JAX f32 reference of the same forward (training-mode batch norm)."""
    orig = x.shape
    x2 = x.reshape(-1, orig[-1]) if x.ndim == 3 else x
    y = x2 @ w.T + b
    mean = y.mean(axis=0, keepdims=True)
    var = ((y - mean) ** 2).mean(axis=0, keepdims=True)
    y = (y - mean) / jnp.sqrt(var + _BN_EPS) * gamma + beta
    y = jnp.maximum(y, 0.0)
    if x.ndim == 3:
        y = y.reshape(orig[0], orig[1], -1)
    return y


if __name__ == "__main__":
    B, T, D, H = 2, 8, 32, 256   # batch, seq, input_dim, num_hidden_nodes

    key = jax.random.PRNGKey(0)
    kx, kw = jax.random.split(key)

    x = jax.random.normal(kx, (B, T, D), dtype=jnp.float32)

    # Deterministic parameter init mirroring LinearWithClipping.__init__:
    #   weight: kaiming_normal_ (fan_in=D, gain=sqrt(2)) -> std = sqrt(2/D)
    #   bias:   zeros_ ; BatchNorm1d: gamma=ones, beta=zeros.
    w = jax.random.normal(kw, (H, D), dtype=jnp.float32) * jnp.sqrt(2.0 / D)
    b = jnp.zeros((H,), dtype=jnp.float32)
    gamma = jnp.ones((H,), dtype=jnp.float32)
    beta = jnp.zeros((H,), dtype=jnp.float32)

    out = fully_connected(x, w, b, gamma, beta, weight_max_norm=0.0,
                          is_training=True)
    out = jax.block_until_ready(out)

    ref = _reference(x, w, b, gamma, beta)
    assert out.shape == (B, T, H), out.shape
    # bf16 matmul operands + bf16 pre-activation storage -> loosened tolerance
    # vs the f32 reference.
    assert jnp.allclose(out, ref, atol=4e-2, rtol=3e-2), "mismatch vs reference"

    print("KERNEL_OK")
</pallas_src>

<mosaic_0001>
module attributes {stable_mosaic.version = 11 : i64} {
  func.func @_matmul_stats_kernel(%arg0: i32, %arg1: i32, %arg2: memref<16x32xbf16, #tpu.memory_space<vmem>>, %arg3: memref<32x128xbf16, #tpu.memory_space<vmem>>, %arg4: memref<16x128xbf16, #tpu.memory_space<vmem>>, %arg5: memref<2x128xf32, #tpu.memory_space<vmem>>) attributes {dimension_semantics = [#tpu.dimension_semantics<parallel>, #tpu.dimension_semantics<arbitrary>], iteration_bounds = array<i64: 2, 1>, scalar_prefetch = 0 : i64, scratch_operands = 0 : i64, tpu.core_type = #tpu.core_type<tc>, window_params = [{transform_indices = @transform_0, window_bounds = array<i64: 16, 32>}, {transform_indices = @transform_1, window_bounds = array<i64: 32, 128>}, {transform_indices = @transform_2, window_bounds = array<i64: 16, 128>}, {transform_indices = @transform_3, window_bounds = array<i64: 2, 128>}]} {
    %c0_i32 = arith.constant 0 : i32
    %0 = arith.cmpi eq, %arg1, %c0_i32 : i32
    %1 = arith.extui %0 : i1 to i32
    %c0_i32_0 = arith.constant 0 : i32
    %2 = arith.cmpi ne, %1, %c0_i32_0 : i32
    scf.if %2 {
      %cst_15 = arith.constant 0.000000e+00 : f32
      %19 = vector.broadcast %cst_15 : f32 to vector<2x128xf32>
      %c0_16 = arith.constant 0 : index
      %c0_17 = arith.constant 0 : index
      %20 = vector.load %arg5[%c0_16, %c0_17] : memref<2x128xf32, #tpu.memory_space<vmem>>, vector<2x128xf32>
      tpu.vector_store %arg5[%c0_16, %c0_17], %19 {strides = array<i32>} : memref<2x128xf32, #tpu.memory_space<vmem>>, vector<2x128xf32>,
    } else {
    }
    %c0 = arith.constant 0 : index
    %c0_1 = arith.constant 0 : index
    %3 = vector.load %arg2[%c0, %c0_1] : memref<16x32xbf16, #tpu.memory_space<vmem>>, vector<16x32xbf16>
    %c0_2 = arith.constant 0 : index
    %c0_3 = arith.constant 0 : index
    %4 = vector.load %arg3[%c0_2, %c0_3] : memref<32x128xbf16, #tpu.memory_space<vmem>>, vector<32x128xbf16>
    %cst = arith.constant dense<0.000000e+00> : vector<16x128xf32>
    %5 = tpu.matmul %3, %4, %cst {dimension_numbers = #tpu.dot_dimension_numbers<[1], [0], [0], [1], [0, 0, 1, 1], [], []>} : vector<16x32xbf16>, vector<32x128xbf16>, vector<16x128xf32> -> vector<16x128xf32>
    %6 = arith.truncf %5 : vector<16x128xf32> to vector<16x128xbf16>
    %c0_4 = arith.constant 0 : index
    %c0_5 = arith.constant 0 : index
    %7 = vector.load %arg4[%c0_4, %c0_5] : memref<16x128xbf16, #tpu.memory_space<vmem>>, vector<16x128xbf16>
    tpu.vector_store %arg4[%c0_4, %c0_5], %6 {strides = array<i32>} : memref<16x128xbf16, #tpu.memory_space<vmem>>, vector<16x128xbf16>,
    %c0_6 = arith.constant 0 : index
    %c0_7 = arith.constant 0 : index
    %8 = vector.load %arg5[%c0_6, %c0_7] : memref<2x128xf32, #tpu.memory_space<vmem>>, vector<1x128xf32>
    %cst_8 = arith.constant dense<0.000000e+00> : vector<128xf32>
    %9 = vector.multi_reduction <add>, %5, %cst_8 [0] : vector<16x128xf32> to vector<128xf32>
    %10 = vector.shape_cast %9 : vector<128xf32> to vector<1x128xf32>
    %11 = arith.addf %8, %10 : vector<1x128xf32>
    %c0_9 = arith.constant 0 : index
    %c0_10 = arith.constant 0 : index
    %12 = vector.load %arg5[%c0_9, %c0_10] : memref<2x128xf32, #tpu.memory_space<vmem>>, vector<1x128xf32>
    tpu.vector_store %arg5[%c0_9, %c0_10], %11 {strides = array<i32>} : memref<2x128xf32, #tpu.memory_space<vmem>>, vector<1x128xf32>,
    %c1 = arith.constant 1 : index
    %c0_11 = arith.constant 0 : index
    %13 = vector.load %arg5[%c1, %c0_11] : memref<2x128xf32, #tpu.memory_space<vmem>>, vector<1x128xf32>
    %14 = arith.mulf %5, %5 : vector<16x128xf32>
    %cst_12 = arith.constant dense<0.000000e+00> : vector<128xf32>
    %15 = vector.multi_reduction <add>, %14, %cst_12 [0] : vector<16x128xf32> to vector<128xf32>
    %16 = vector.shape_cast %15 : vector<128xf32> to vector<1x128xf32>
    %17 = arith.addf %13, %16 : vector<1x128xf32>
    %c1_13 = arith.constant 1 : index
    %c0_14 = arith.constant 0 : index
    %18 = vector.load %arg5[%c1_13, %c0_14] : memref<2x128xf32, #tpu.memory_space<vmem>>, vector<1x128xf32>
    tpu.vector_store %arg5[%c1_13, %c0_14], %17 {strides = array<i32>} : memref<2x128xf32, #tpu.memory_space<vmem>>, vector<1x128xf32>,
    return
  }
  func.func @transform_0(%arg0: i32, %arg1: i32) -> (i32, i32) {
    %c0_i32 = arith.constant 0 : i32
    %c0_i32_0 = arith.constant 0 : i32
    return %arg1, %c0_i32 : i32, i32
  }
  func.func @transform_1(%arg0: i32, %arg1: i32) -> (i32, i32) {
    %c0_i32 = arith.constant 0 : i32
    %c0_i32_0 = arith.constant 0 : i32
    return %c0_i32, %arg0 : i32, i32
  }
  func.func @transform_2(%arg0: i32, %arg1: i32) -> (i32, i32) {
    %c0_i32 = arith.constant 0 : i32
    return %arg1, %arg0 : i32, i32
  }
  func.func @transform_3(%arg0: i32, %arg1: i32) -> (i32, i32) {
    %c0_i32 = arith.constant 0 : i32
    %c0_i32_0 = arith.constant 0 : i32
    return %c0_i32, %arg0 : i32, i32
  }
}

</mosaic_0001>

<llo_original>
// kernel: tpu_custom_call.1
$region0: #{tpu_custom_call.1}
  #allocation0 [shape = 'u32[]', space=smem, size = 0x4, offset = 0x4, fixed_abs, tag = 'smem constant byte address 0x4 - core index']
  #allocation1 [shape = 'u32[72,128]{1,0:T(1,128)}', space=vmem, size = 0x9000, scoped, tag = 'internal scratch']
  %s0 = inlined_call_operand.hbm [shape: bf16[16,32], index: 0, kind: input, shape index: {}]
  %s1 = inlined_call_operand.hbm [shape: bf16[32,256], index: 1, kind: input, shape index: {}]
  %s2 = inlined_call_operand.hbm [shape: bf16[16,256], index: 2, kind: output, shape index: {0}]
  %s3 = inlined_call_operand.hbm [shape: f32[2,256], index: 3, kind: output, shape index: {1}]
  %4 = xla_tuple %s2, %s3
  %s5 = sld [smem:[#allocation0]]
  $region61: #{tpu_custom_call.1} parent=0
    _
  %s7 = ssub.s32 1, %s5
  %s8 = scalar_select 0, %s7, %s5
  $region1: #{tpu_custom_call.1} parent=0
    #allocation2 [shape = 'u8[4096]{0}', space=vmem, size = 0x1000, scoped, tag = 'input window, operand 0, single buffered']
    #allocation3 [shape = 's32[2]{0}', space=sflag, size = 0x8, scoped, tag = 'scoped memory for tpu_custom_call.1']
    #allocation4 [shape = 's32[2]{0}', space=sflag, size = 0x8, scoped, tag = 'scoped memory for tpu_custom_call.1']
    #allocation5 [shape = 'u8[16384]{0}', space=vmem, size = 0x4000, scoped, tag = 'input window, operand 1']
    #allocation6 [shape = 's32[2]{0}', space=sflag, size = 0x8, scoped, tag = 'scoped memory for tpu_custom_call.1']
    #allocation7 [shape = 'u8[8192]{0}', space=vmem, size = 0x2000, scoped, tag = 'output window, operand 0']
    #allocation8 [shape = 'u8[2048]{0}', space=vmem, size = 0x800, scoped, tag = 'output window, operand 1']
    #allocation9 [shape = 's32[2]{0}', space=sflag, size = 0x8, scoped, tag = 'scoped memory for tpu_custom_call.1']
    %9 = vsyncpa [#allocation3], 0
    %10 = vsyncpa [#allocation6], 0
    %s11 = scalar_lea.sflag [#allocation6], 1
    %12 = vsyncpa %s11, 0
    %13 = vsyncpa [#allocation4], 0
    %s14 = scalar_lea.sflag [#allocation4], 1
    %15 = vsyncpa %s14, 0
    %16 = vsyncpa [#allocation9], 0
    %s17 = scalar_lea.sflag [#allocation9], 1
    %18 = vsyncpa %s17, 0
    loop: start=0, step=1, limit=4
    $region2: #{tpu_custom_call.1} parent=1 // loop_pre_header
      _
    $region3: #{tpu_custom_call.1} parent=1 // loop_header
      %s20 = sphi 0, %s24
      %p21 = scmp.ge.s32.totalorder %s20, 4
      %s27 = sphi 0, %s39
      %s28 = sphi 0, %s35
      %s29 = sphi 0, %s27
      %s30 = sphi 0, %s28
      %s31 = sphi 0, %s29
      %s32 = sphi 0, %s30
      %s42 = sphi 0, %s44
      %s45 = sphi 0, %s42
      %s46 = sphi 0, %s45
      %s62 = sphi 0, %s46
      %s68 = sphi 0, %s70
      %s71 = sphi 0, %s68
      %s72 = sphi 0, %s71
      %s88 = sphi 0, %s72
      %s96 = sphi 0, %s98
      %s99 = sphi 0, %s96
      %s100 = sphi 0, %s99
      %s116 = sphi 0, %s100
      %s122 = sphi 0, %s124
      %s125 = sphi 0, %s122
      %s126 = sphi 0, %s125
      %s142 = sphi 0, %s126
    $region4: #{tpu_custom_call.1} parent=1 // loop_header_branch
      %23 = sbr.rel (%p21) target = $region8
    $region5: #{tpu_custom_call.1} parent=1 // loop_body
      %s25 = ssub.s32 %s20, 1
      %s26 = ssub.s32 %s20, 2
      %s33 = sadd.s32 1, %s28
      %p34 = scmp.ge.s32.totalorder %s33, 1
      %s35 = scalar_select %p34, 0, %s33
      %s36 = sadd.s32 1, %s27
      %s37 = scalar_select %p34, %s36, %s27
      %p38 = scmp.ge.s32.totalorder %s37, 2
      %s39 = scalar_select %p38, 0, %s37
      %s40 = ssub.s32 %s28, %s35
      %p41 = scmp.eq.s32.totalorder %s40, 0
      %s43 = sadd.s32 %s42, 1
      %s44 = scalar_select %p41, %s42, %s43
      %p47 = pneg %p41
      %p48 = scmp.eq.s32.totalorder %s20, 1
      %p49 = por %p47, %p48
      %p50 = scmp.ne.s32.totalorder %s42, %s45
      %p51 = scmp.eq.s32.totalorder %s20, 0
      %p52 = por %p50, %p51
      %p53 = scmp.ne.s32.totalorder %s42, %s45
      %p54 = scmp.eq.s32.totalorder %s25, 1
      %p55 = por %p53, %p54
      %p56 = scmp.ne.s32.totalorder %s45, %s46
      %p57 = scmp.eq.s32.totalorder %s25, 0
      %p58 = por %p56, %p57
      %p59 = scmp.ne.s32.totalorder %s45, %s46
      %p60 = scmp.eq.s32.totalorder %s26, 1
      %p61 = por %p59, %p60
      %p63 = scmp.ne.s32.totalorder %s46, %s62
      %p64 = scmp.eq.s32.totalorder %s26, 0
      %p65 = por %p63, %p64
      %s66 = ssub.s32 %s27, %s39
      %p67 = scmp.eq.s32.totalorder %s66, 0
      %s69 = sadd.s32 %s68, 1
      %s70 = scalar_select %p67, %s68, %s69
      %p73 = pneg %p67
      %p74 = scmp.eq.s32.totalorder %s20, 1
      %p75 = por %p73, %p74
      %p76 = scmp.ne.s32.totalorder %s68, %s71
      %p77 = scmp.eq.s32.totalorder %s20, 0
      %p78 = por %p76, %p77
      %p79 = scmp.ne.s32.totalorder %s68, %s71
      %p80 = scmp.eq.s32.totalorder %s25, 1
      %p81 = por %p79, %p80
      %p82 = scmp.ne.s32.totalorder %s71, %s72
      %p83 = scmp.eq.s32.totalorder %s25, 0
      %p84 = por %p82, %p83
      %p85 = scmp.ne.s32.totalorder %s71, %s72
      %p86 = scmp.eq.s32.totalorder %s26, 1
      %p87 = por %p85, %p86
      %p89 = scmp.ne.s32.totalorder %s72, %s88
      %p90 = scmp.eq.s32.totalorder %s26, 0
      %p91 = por %p89, %p90
      %s92 = ssub.s32 %s28, %s35
      %s93 = ssub.s32 %s27, %s39
      %s94 = sor.u32 %s92, %s93
      %p95 = scmp.eq.s32.totalorder %s94, 0
      %s97 = sadd.s32 %s96, 1
      %s98 = scalar_select %p95, %s96, %s97
      %p101 = pneg %p95
      %p102 = scmp.eq.s32.totalorder %s20, 1
      %p103 = por %p101, %p102
      %p104 = scmp.ne.s32.totalorder %s96, %s99
      %p105 = scmp.eq.s32.totalorder %s20, 0
      %p106 = por %p104, %p105
      %p107 = scmp.ne.s32.totalorder %s96, %s99
      %p108 = scmp.eq.s32.totalorder %s25, 1
      %p109 = por %p107, %p108
      %p110 = scmp.ne.s32.totalorder %s99, %s100
      %p111 = scmp.eq.s32.totalorder %s25, 0
      %p112 = por %p110, %p111
      %p113 = scmp.ne.s32.totalorder %s99, %s100
      %p114 = scmp.eq.s32.totalorder %s26, 1
      %p115 = por %p113, %p114
      %p117 = scmp.ne.s32.totalorder %s100, %s116
      %p118 = scmp.eq.s32.totalorder %s26, 0
      %p119 = por %p117, %p118
      %s120 = ssub.s32 %s27, %s39
      %p121 = scmp.eq.s32.totalorder %s120, 0
      %s123 = sadd.s32 %s122, 1
      %s124 = scalar_select %p121, %s122, %s123
      %p127 = pneg %p121
      %p128 = scmp.eq.s32.totalorder %s20, 1
      %p129 = por %p127, %p128
      %p130 = scmp.ne.s32.totalorder %s122, %s125
      %p131 = scmp.eq.s32.totalorder %s20, 0
      %p132 = por %p130, %p131
      %p133 = scmp.ne.s32.totalorder %s122, %s125
      %p134 = scmp.eq.s32.totalorder %s25, 1
      %p135 = por %p133, %p134
      %p136 = scmp.ne.s32.totalorder %s125, %s126
      %p137 = scmp.eq.s32.totalorder %s25, 0
      %p138 = por %p136, %p137
      %p139 = scmp.ne.s32.totalorder %s125, %s126
      %p140 = scmp.eq.s32.totalorder %s26, 1
      %p141 = por %p139, %p140
      %p143 = scmp.ne.s32.totalorder %s126, %s142
      %p144 = scmp.eq.s32.totalorder %s26, 0
      %p145 = por %p143, %p144
      %p146 = scmp.le.s32.totalorder 1, %s20
      %p147 = scmp.lt.s32.totalorder %s20, 3
      %p148 = pnand %p146, %p147
      %p149 = pneg %p148
      // Predicated region
      $region9: #{tpu_custom_call.1} parent=5 // pred_check
        _
      $region10: #{tpu_custom_call.1} parent=5 // pred_check_branch
        %151 = sbr.rel (%p148) target = $region12
      $region11: #{tpu_custom_call.1} parent=5 // pred_region
        %s152 = ssub.s32 %s20, 1
        // Predicated region
        $region13: #{tpu_custom_call.1} parent=11 // pred_check
          %p153 = pneg %p58
        $region14: #{tpu_custom_call.1} parent=11 // pred_check_branch
          %155 = sbr.rel (%p153) target = $region16
        $region15: #{tpu_custom_call.1} parent=11 // pred_region
          %s156 = smul.u32 2, %s30
          %158 = vsyncadd [#allocation3], 0
          %s159 = smul.addr %s156, 4
          %s160 = scalar_lea.hbm %s0, %s159
          %s161 = sshll.u32 %s160, 4
          %s162 = int_to_ptr.hbm [resolvable:$true] %s161
          %s163 = sshll.u32 [#allocation2], 4
          %s164 = int_to_ptr.vmem [resolvable:$true] %s163
          %169 = dma.hbm_to_vmem [thread:$0]  %s162, 128, %s164, [#allocation3], 64, 64, 4
        $region16: #{tpu_custom_call.1} parent=11 // pred_fallthru
          _
      $region12: #{tpu_custom_call.1} parent=5 // pred_fallthru
        _
      %p170 = scmp.lt.s32.totalorder %s20, 2
      // Predicated region
      $region17: #{tpu_custom_call.1} parent=5 // pred_check
        %p171 = pneg %p170
      $region18: #{tpu_custom_call.1} parent=5 // pred_check_branch
        %173 = sbr.rel (%p171) target = $region20
      $region19: #{tpu_custom_call.1} parent=5 // pred_region
        // Predicated region
        $region21: #{tpu_custom_call.1} parent=19 // pred_check
          %p174 = pneg %p78
        $region22: #{tpu_custom_call.1} parent=19 // pred_check_branch
          %176 = sbr.rel (%p174) target = $region24
        $region23: #{tpu_custom_call.1} parent=19 // pred_region
          %s177 = sand.u32 %s68, 1
          %s178 = scalar_lea.sflag [#allocation6], %s177
          %s179 = sand.u32 %s68, 1
          %s180 = smul.addr %s179, 16
          %s181 = scalar_lea.vmem [#allocation5], %s180
          %183 = vsyncadd %s178, 0
          %s184 = smul.addr %s27, 4
          %s185 = scalar_lea.hbm %s1, %s184
          %s186 = sshll.u32 %s185, 4
          %s187 = int_to_ptr.hbm [resolvable:$true] %s186
          %s188 = sshll.u32 %s181, 4
          %s189 = int_to_ptr.vmem [resolvable:$true] %s188
          %194 = dma.hbm_to_vmem [thread:$0]  %s187, 256, %s189, %s178, 128, 64, 4
        $region24: #{tpu_custom_call.1} parent=19 // pred_fallthru
          _
      $region20: #{tpu_custom_call.1} parent=5 // pred_fallthru
        _
      %p195 = scmp.le.s32.totalorder 1, %s20
      %p196 = scmp.lt.s32.totalorder %s20, 3
      %p197 = pnand %p195, %p196
      %p198 = pneg %p197
      // Predicated region
      $region25: #{tpu_custom_call.1} parent=5 // pred_check
        _
      $region26: #{tpu_custom_call.1} parent=5 // pred_check_branch
        %200 = sbr.rel (%p197) target = $region28
      $region27: #{tpu_custom_call.1} parent=5 // pred_region
        %s201 = ssub.s32 %s20, 1
        // Predicated region
        $region29: #{tpu_custom_call.1} parent=27 // pred_check
          %p202 = pneg %p58
        $region30: #{tpu_custom_call.1} parent=27 // pred_check_branch
          %204 = sbr.rel (%p202) target = $region32
        $region31: #{tpu_custom_call.1} parent=27 // pred_region
          %206 = dma.done [#allocation3], 128
        $region32: #{tpu_custom_call.1} parent=27 // pred_fallthru
          _
        %s207 = sand.u32 %s71, 1
        %s208 = scalar_lea.sflag [#allocation6], %s207
        %s209 = sand.u32 %s71, 1
        %s210 = smul.addr %s209, 16
        %s211 = scalar_lea.vmem [#allocation5], %s210
        // Predicated region
        $region33: #{tpu_custom_call.1} parent=27 // pred_check
          %p212 = pneg %p84
        $region34: #{tpu_custom_call.1} parent=27 // pred_check_branch
          %214 = sbr.rel (%p212) target = $region36
        $region35: #{tpu_custom_call.1} parent=27 // pred_region
          %216 = dma.done %s208, 256
        $region36: #{tpu_custom_call.1} parent=27 // pred_fallthru
          _
        %p217 = pneg %p58
        %p218 = pneg %p55
        %s219 = sand.u32 %s71, 1
        %s220 = scalar_lea.sflag [#allocation6], %s219
        %s221 = sand.u32 %s71, 1
        %s222 = smul.addr %s221, 16
        %s223 = scalar_lea.vmem [#allocation5], %s222
        %p224 = pneg %p84
        %p225 = pneg %p81
        %p226 = pneg %p112
        %p227 = pneg %p109
        %s228 = sand.u32 %s99, 1
        %s229 = scalar_lea.sflag [#allocation4], %s228
        %s230 = sand.u32 %s99, 1
        %s231 = smul.addr %s230, 8
        %s232 = scalar_lea.vmem [#allocation7], %s231
        %p233 = pneg %p138
        %p234 = pneg %p135
        %s235 = sand.u32 %s125, 1
        %s236 = scalar_lea.sflag [#allocation9], %s235
        %s237 = sand.u32 %s125, 1
        %s238 = smul.addr %s237, 2
        %s239 = scalar_lea.vmem [#allocation8], %s238
        %s240 = smul.u32 2, %s30
        %s241 = smul.u32 2, %s30
        %p243 = scmp.eq.s32.totalorder %s30, 0
        // Predicated region
        $region37: #{tpu_custom_call.1} parent=27 // pred_check
          %p244 = pneg %p243
        $region38: #{tpu_custom_call.1} parent=27 // pred_check_branch
          %246 = sbr.rel (%p244) target = $region40
        $region39: #{tpu_custom_call.1} parent=27 // pred_region
          %247 = vst [vmem:[%s239] sm:$0x3] 0.0
        $region40: #{tpu_custom_call.1} parent=27 // pred_fallthru
          _
        %v248 = vld [vmem:[#allocation2] sm:$0xf]
        %v249 = vld [vmem:[#allocation2 + $0x4] sm:$0xf]
        %v250 = vld [vmem:[%s211] sm:$0xf]
        %v251 = vld [vmem:[%s211 + $0x4] sm:$0xf]
        %v252 = vld [vmem:[%s211 + $0x8] sm:$0xf]
        %v253 = vld [vmem:[%s211 + $0xc] sm:$0xf]
        %v256 = vunpack.c.l.b16 %v248
        %v257 = vunpack.c.l.b16 %v249
        %v258 = vpack.c.b16 %v257, %v256
        %v263 = vunpack.c.l.b16 %v250
        %v264 = vunpack.c.l.b16 %v251
        %v265 = vunpack.c.l.b16 %v252
        %v266 = vunpack.c.l.b16 %v253
        %v267 = vpack.c.b16 %v264, %v263
        %v268 = vpack.c.b16 %v266, %v265
        %vm271 = vcmask 261120
        %v273 = vsel %vm271, %v258, 0
        %275 = vmatpush.bf16.msra.mxu0 0
        %276 = vmatpush.bf16.msra.mxu0 0
        %277 = vmatpush.bf16.msra.mxu0 0
        %278 = vmatpush.bf16.msra.mxu0 0
        %279 = vmatpush.bf16.msra.mxu0 0
        %280 = vmatpush.bf16.msra.mxu0 0
        %281 = vmatpush.bf16.msra.mxu0 %v268
        %282 = vmatpush.bf16.msra.mxu0 %v267
        %283 = vmatmul.bf16.gmra.mxu0 %v273
        %v284 = vpop.f32.mrf.mxu0
        %v285 = vadd.f32 0.0, %v284
        %v286 = vpop.f32.mrf.mxu0
        %v287 = vadd.f32 0.0, %v286
        %288 = vdwg.mxu0
        %v289 = vpack.c.bf16 %v285, %v285
        %v290 = vpack.c.bf16 %v287, %v287
        %291 = vst [vmem:[%s232] sm:$0xf] %v289
        %292 = vst [vmem:[%s232 + $0x4] sm:$0xf] %v290
        %v293 = vld [vmem:[%s239] sm:$0x1]
        %v294 = vadd.f32 %v285, %v287
        %v295 = vrot.slane %v294, 4
        %v296 = vadd.f32 %v294, %v295
        %v297 = vrot.slane %v296, 2
        %v298 = vadd.f32 %v296, %v297
        %v299 = vrot.slane %v298, 1
        %v300 = vadd.f32 %v298, %v299
        %v301 = vadd.f32 %v293, %v300
        %302 = vst [vmem:[%s239] sm:$0x1] %v301
        %v303 = vld [vmem:[%s239 + $0x1] sm:$0x1]
        %v304 = vmul.f32 %v285, %v285
        %v305 = vmul.f32 %v287, %v287
        %v306 = vadd.f32 %v304, %v305
        %v307 = vrot.slane %v306, 4
        %v308 = vadd.f32 %v306, %v307
        %v309 = vrot.slane %v308, 2
        %v310 = vadd.f32 %v308, %v309
        %v311 = vrot.slane %v310, 1
        %v312 = vadd.f32 %v310, %v311
        %v313 = vadd.f32 %v303, %v312
        %314 = vst [vmem:[%s239 + $0x1] sm:$0x1] %v313
        %s315 = sand.u32 %s99, 1
        %s316 = scalar_lea.sflag [#allocation4], %s315
        %s317 = sand.u32 %s99, 1
        %s318 = smul.addr %s317, 8
        %s319 = scalar_lea.vmem [#allocation7], %s318
        %s320 = sand.u32 %s125, 1
        %s321 = scalar_lea.sflag [#allocation9], %s320
        %s322 = sand.u32 %s125, 1
        %s323 = smul.addr %s322, 2
        %s324 = scalar_lea.vmem [#allocation8], %s323
        // Predicated region
        $region41: #{tpu_custom_call.1} parent=27 // pred_check
          %p325 = pneg %p109
        $region42: #{tpu_custom_call.1} parent=27 // pred_check_branch
          %327 = sbr.rel (%p325) target = $region44
        $region43: #{tpu_custom_call.1} parent=27 // pred_region
          %s328 = smul.u32 2, %s30
          %330 = vsyncadd %s316, 0
          %s331 = smul.addr %s328, 2
          %s332 = sadd.s32 %s29, %s331
          %s333 = smul.addr %s332, 4
          %s334 = scalar_lea.hbm %s2, %s333
          %s335 = sshll.u32 %s319, 4
          %s336 = int_to_ptr.vmem [resolvable:$true] %s335
          %s337 = sshll.u32 %s334, 4
          %s338 = int_to_ptr.hbm [resolvable:$true] %s337
          %343 = dma.vmem_to_hbm [thread:$0]  %s336, 128, %s338, %s316, 64, 128, 4
        $region44: #{tpu_custom_call.1} parent=27 // pred_fallthru
          _
        // Predicated region
        $region45: #{tpu_custom_call.1} parent=27 // pred_check
          %p344 = pneg %p135
        $region46: #{tpu_custom_call.1} parent=27 // pred_check_branch
          %346 = sbr.rel (%p344) target = $region48
        $region47: #{tpu_custom_call.1} parent=27 // pred_region
          %348 = vsyncadd %s321, 0
          %s349 = smul.addr %s29, 2
          %s350 = scalar_lea.hbm %s3, %s349
          %s352 = sshll.u32 %s324, 4
          %s353 = int_to_ptr.vmem [resolvable:$true] %s352
          %s354 = sshll.u32 %s350, 4
          %s355 = int_to_ptr.hbm [resolvable:$true] %s354
          %357 = dma.vmem_to_hbm [thread:$0]  %s353, 32, %s355, %s321
        $region48: #{tpu_custom_call.1} parent=27 // pred_fallthru
          _
      $region28: #{tpu_custom_call.1} parent=5 // pred_fallthru
        _
      %p358 = scmp.le.s32.totalorder 2, %s20
      // Predicated region
      $region49: #{tpu_custom_call.1} parent=5 // pred_check
        %p359 = pneg %p358
      $region50: #{tpu_custom_call.1} parent=5 // pred_check_branch
        %361 = sbr.rel (%p359) target = $region52
      $region51: #{tpu_custom_call.1} parent=5 // pred_region
        %s362 = ssub.s32 %s20, 2
        // Predicated region
        $region53: #{tpu_custom_call.1} parent=51 // pred_check
          %p363 = pneg %p115
        $region54: #{tpu_custom_call.1} parent=51 // pred_check_branch
          %365 = sbr.rel (%p363) target = $region56
        $region55: #{tpu_custom_call.1} parent=51 // pred_region
          %s366 = sand.u32 %s100, 1
          %s367 = scalar_lea.sflag [#allocation4], %s366
          %s368 = sand.u32 %s100, 1
          %s369 = smul.addr %s368, 8
          %s370 = scalar_lea.vmem [#allocation7], %s369
          %372 = dma.done %s367, 128
        $region56: #{tpu_custom_call.1} parent=51 // pred_fallthru
          _
        // Predicated region
        $region57: #{tpu_custom_call.1} parent=51 // pred_check
          %p373 = pneg %p141
        $region58: #{tpu_custom_call.1} parent=51 // pred_check_branch
          %375 = sbr.rel (%p373) target = $region60
        $region59: #{tpu_custom_call.1} parent=51 // pred_region
          %s376 = sand.u32 %s126, 1
          %s377 = scalar_lea.sflag [#allocation9], %s376
          %s378 = sand.u32 %s126, 1
          %s379 = smul.addr %s378, 2
          %s380 = scalar_lea.vmem [#allocation8], %s379
          %382 = dma.done %s377, 32
        $region60: #{tpu_custom_call.1} parent=51 // pred_fallthru
          _
      $region52: #{tpu_custom_call.1} parent=5 // pred_fallthru
        _
    $region6: #{tpu_custom_call.1} parent=1 // loop_footer
      %s24 = sadd.s32 1, %s20
    $region7: #{tpu_custom_call.1} parent=1 // loop_footer_branch
      %19 = sbr.rel target = $region3
    $region8: #{tpu_custom_call.1} parent=1 // loop_exit
      _
    %383 = vsyncpa [#allocation3], 1
    %s384 = scalar_lea.sflag [#allocation3], 1
    %385 = vsyncpa %s384, 1
    %386 = vsyncpa [#allocation6], 1
    %s387 = scalar_lea.sflag [#allocation6], 1
    %388 = vsyncpa %s387, 1
    %389 = vsyncpa [#allocation4], 1
    %s390 = scalar_lea.sflag [#allocation4], 1
    %391 = vsyncpa %s390, 1
    %392 = vsyncpa [#allocation9], 1
    %s393 = scalar_lea.sflag [#allocation9], 1
    %394 = vsyncpa %s393, 1

</llo_original>
